<compile_context>
chip_gen: v7x
topology: tpu7x:2x2x1
jax: 0.10.0
libtpu: 0.0.40
codegen_flags: <defaults>
</compile_context>

<pallas_src>
import math

import jax
import jax.numpy as jnp
from jax.experimental import pallas as pl
from jax.experimental.pallas import tpu as pltpu


# --------------------------------------------------------------------------
# Kernels
# --------------------------------------------------------------------------
def _drop_path_kernel(scale_ref, x_ref, o_ref):
    # scale_ref: (B,) f32 in SMEM; x_ref / o_ref: (1, tr, lanes) VMEM tiles.
    b = pl.program_id(0)
    s = scale_ref[b].astype(x_ref.dtype)  # in-dtype multiply (exact for f32)
    o_ref[...] = x_ref[...] * s


def _drop_path_add_kernel(scale_ref, x_ref, sc_ref, o_ref):
    # Fused Swin residual: out = shortcut + drop_path(x).
    b = pl.program_id(0)
    s = scale_ref[b].astype(x_ref.dtype)
    o_ref[...] = sc_ref[...] + x_ref[...] * s


# --------------------------------------------------------------------------
# Generation-aware tiling helpers
# --------------------------------------------------------------------------
def _physical_vmem_bytes():
    try:
        info = pltpu.get_tpu_info()
        v = getattr(info, "vmem_capacity_bytes", None)
        if v:
            return int(v)
    except Exception:
        pass
    return 64 * 1024 * 1024  # conservative fallback (v7x per-TC VMEM)


def _sublane_align(dtype):
    # 8 rows for 4-byte, 16 for 2-byte (bf16), 32 for 1-byte dtypes.
    return max(8, 32 // max(1, jnp.dtype(dtype).itemsize))


def _lane_layout(per_sample_elems):
    """Collapse the per-sample extent onto a lane-dense (rows, lanes, pad)."""
    for lanes in (1024, 512, 256, 128):
        if per_sample_elems % lanes == 0:
            return per_sample_elems // lanes, lanes, 0
    padded = ((per_sample_elems + 127) // 128) * 128
    return padded // 128, 128, padded - per_sample_elems


def _choose_row_tile(rows, lanes, dtype, n_streams, row_tile=None):
    if row_tile is not None:
        return min(row_tile, rows)
    align = _sublane_align(dtype)
    itemsize = jnp.dtype(dtype).itemsize
    physical = _physical_vmem_bytes()
    # Keep 2x-buffered residency of every streamed array (inputs + output)
    # under ~half of physical VMEM; cap tiles at 8 MiB (streaming saturates).
    budget = max(1 << 20, min(8 << 20, (physical // 2) // (2 * n_streams)))
    max_rows = max(align, budget // (lanes * itemsize))
    if rows <= max_rows:
        return rows  # block dim == full array dim is always legal
    return max(align, (max_rows // align) * align)


def _vmem_limit_bytes(tile_bytes, n_streams):
    physical = _physical_vmem_bytes()
    need = 2 * n_streams * tile_bytes + (4 << 20)  # double-buffered + slack
    return int(min(max(need, 32 << 20), (physical * 3) // 4))


# --------------------------------------------------------------------------
# Driver
# --------------------------------------------------------------------------
def _run_scaled(kernel, arrays, scale, row_tile=None):
    """Run `kernel` over lane-dense per-sample tiles of `arrays` (same shapes)."""
    x = arrays[0]
    B = x.shape[0]
    orig_shape = x.shape
    per_sample = math.prod(x.shape[1:]) if x.ndim > 1 else 1
    rows, lanes, pad = _lane_layout(per_sample)

    def to3d(a):
        a2 = a.reshape(B, per_sample)
        if pad:
            a2 = jnp.pad(a2, ((0, 0), (0, pad)))
        return a2.reshape(B, rows, lanes)

    arrays3 = [to3d(a) for a in arrays]

    n_streams = len(arrays) + 1  # inputs + output
    tr = _choose_row_tile(rows, lanes, x.dtype, n_streams, row_tile)

    # v7x megacore: guarantee at least 2 grid steps when the rows can be split.
    align = _sublane_align(x.dtype)
    if B * ((rows + tr - 1) // tr) < 2 and rows >= 2 * align:
        tr = max(align, (((rows + 1) // 2) // align) * align)

    grid = (B, pl.cdiv(rows, tr))
    tile_bytes = tr * lanes * jnp.dtype(x.dtype).itemsize
    block = pl.BlockSpec((1, tr, lanes), lambda b, i: (b, i, 0))

    out = pl.pallas_call(
        kernel,
        out_shape=jax.ShapeDtypeStruct((B, rows, lanes), x.dtype),
        grid_spec=pltpu.PrefetchScalarGridSpec(
            num_scalar_prefetch=0,
            grid=grid,
            in_specs=[pl.BlockSpec(memory_space=pltpu.MemorySpace.SMEM)]
            + [block] * len(arrays),
            out_specs=block,
        ),
        compiler_params=pltpu.CompilerParams(
            dimension_semantics=("parallel", "parallel"),
            vmem_limit_bytes=_vmem_limit_bytes(tile_bytes, n_streams),
        ),
    )(scale.astype(jnp.float32), *arrays3)

    if pad:
        out = out.reshape(B, rows * lanes)[:, :per_sample]
    return out.reshape(orig_shape)


def _scale_per_sample(x, scale, row_tile=None):
    """out[b] = x[b] * scale[b] (exposed for tests / ragged-tile exercise)."""
    return _run_scaled(_drop_path_kernel, [x], scale, row_tile=row_tile)


def _per_sample_scale(drop_prob, key, batch):
    keep_prob = 1.0 - drop_prob
    u = jax.random.uniform(key, (batch,), dtype=jnp.float32)
    mask = jnp.floor(jnp.float32(keep_prob) + u)
    return mask / jnp.float32(keep_prob)


def drop_path(x, drop_prob=0.0, *, key=None, training=False):
    """Pallas/JAX equivalent of drop_path_f / DropPath.forward.

    drop_prob and training must be static (Python values), mirroring the
    torch early return.
    """
    if drop_prob == 0.0 or not training:
        return x
    scale = _per_sample_scale(drop_prob, key, x.shape[0])
    return _run_scaled(_drop_path_kernel, [x], scale)


def drop_path_add(x, shortcut, drop_prob=0.0, *, key=None, training=False):
    """Fused `shortcut + drop_path(x)` — the Swin residual pattern."""
    if drop_prob == 0.0 or not training:
        return shortcut + x
    scale = _per_sample_scale(drop_prob, key, x.shape[0])
    return _run_scaled(_drop_path_add_kernel, [x, shortcut], scale)


# --------------------------------------------------------------------------
# Pure-JAX reference (mirrors the torch implementation)
# --------------------------------------------------------------------------
def _reference(x, drop_prob, key, training):
    if drop_prob == 0.0 or not training:
        return x
    keep_prob = 1.0 - drop_prob
    u = jax.random.uniform(key, (x.shape[0],), dtype=jnp.float32)
    mask = jnp.floor(jnp.float32(keep_prob) + u).astype(x.dtype)
    bshape = (x.shape[0],) + (1,) * (x.ndim - 1)
    return (x / jnp.asarray(keep_prob, x.dtype)) * mask.reshape(bshape)


if __name__ == "__main__":
    key = jax.random.PRNGKey(0)
    kx, kd = jax.random.split(key, 2)

    # Swin-style token tensor (B, L, C) = (2, 16*16, 4).
    B, Hs, Ws, C = 2, 16, 16, 4
    x = jax.random.normal(kx, (B, Hs * Ws, C), dtype=jnp.float32)
    drop_prob = 0.25

    dp = jax.jit(drop_path, static_argnames=("drop_prob", "training"))
    out = jax.block_until_ready(dp(x, drop_prob=drop_prob, key=kd, training=True))
    ref = _reference(x, drop_prob, kd, True)
    assert out.shape == x.shape, out.shape
    assert jnp.allclose(out, ref, atol=1e-5, rtol=1e-5), float(
        jnp.max(jnp.abs(out - ref))
    )

    # Eval / drop_prob == 0 -> identity.
    out_eval = dp(x, drop_prob=drop_prob, key=kd, training=False)
    assert jnp.array_equal(out_eval, x)

    # Fused residual variant (shortcut + drop_path(x)).
    shortcut = jax.random.normal(jax.random.fold_in(kx, 1), x.shape, jnp.float32)
    out_fused = jax.block_until_ready(
        drop_path_add(x, shortcut, drop_prob, key=kd, training=True)
    )
    ref_fused = shortcut + ref
    assert jnp.allclose(out_fused, ref_fused, atol=1e-5, rtol=1e-5), float(
        jnp.max(jnp.abs(out_fused - ref_fused))
    )

    # Odd trailing dims: exercises the pad-to-128-lanes fallback.
    x2 = jax.random.normal(kx, (3, 10, 6), dtype=jnp.float32)
    out2 = jax.block_until_ready(drop_path(x2, 0.5, key=kd, training=True))
    ref2 = _reference(x2, 0.5, kd, True)
    assert jnp.allclose(out2, ref2, atol=1e-5, rtol=1e-5), float(
        jnp.max(jnp.abs(out2 - ref2))
    )

    # Ragged row-tile case: force a tile that does not divide the row extent
    # (rows=10, lanes=1024, tr=8) to exercise padded-read / masked-write.
    x3 = jax.random.normal(kx, (2, 40, 256), dtype=jnp.float32)
    scale3 = jnp.array([2.0, 0.0], dtype=jnp.float32)
    out3 = jax.block_until_ready(_scale_per_sample(x3, scale3, row_tile=8))
    ref3 = x3 * scale3[:, None, None]
    assert jnp.allclose(out3, ref3, atol=1e-6, rtol=1e-6), float(
        jnp.max(jnp.abs(out3 - ref3))
    )

    # bf16 path: 16-aligned sublane tiles and in-dtype multiply.
    xb = jax.random.normal(kx, (2, 256, 32), dtype=jnp.bfloat16)
    outb = jax.block_until_ready(drop_path(xb, 0.25, key=kd, training=True))
    refb = _reference(xb, 0.25, kd, True)
    assert jnp.allclose(
        outb.astype(jnp.float32), refb.astype(jnp.float32), atol=5e-2, rtol=3e-2
    ), float(jnp.max(jnp.abs(outb.astype(jnp.float32) - refb.astype(jnp.float32))))

    print("KERNEL_OK")
</pallas_src>

<mosaic_0001>
module attributes {stable_mosaic.version = 11 : i64} {
  func.func @_drop_path_kernel(%arg0: i32, %arg1: i32, %arg2: memref<2xf32, #tpu.memory_space<smem>>, %arg3: memref<1x1x1024xf32, #tpu.memory_space<vmem>>, %arg4: memref<1x1x1024xf32, #tpu.memory_space<vmem>>) attributes {dimension_semantics = [#tpu.dimension_semantics<parallel>, #tpu.dimension_semantics<parallel>], iteration_bounds = array<i64: 2, 1>, scalar_prefetch = 0 : i64, scratch_operands = 0 : i64, tpu.core_type = #tpu.core_type<tc>, window_params = [{transform_indices = @transform_0, window_bounds = array<i64: 2>}, {transform_indices = @transform_1, window_bounds = array<i64: 1, 1, 1024>}, {transform_indices = @transform_2, window_bounds = array<i64: 1, 1, 1024>}]} {
    %0 = arith.index_cast %arg0 : i32 to index
    %1 = memref.load %arg2[%0] : memref<2xf32, #tpu.memory_space<smem>>
    %c0 = arith.constant 0 : index
    %c0_0 = arith.constant 0 : index
    %c0_1 = arith.constant 0 : index
    %2 = vector.load %arg3[%c0, %c0_0, %c0_1] : memref<1x1x1024xf32, #tpu.memory_space<vmem>>, vector<1x1x1024xf32>
    %3 = vector.broadcast %1 : f32 to vector<1x1x1024xf32>
    %4 = arith.mulf %2, %3 : vector<1x1x1024xf32>
    %c0_2 = arith.constant 0 : index
    %c0_3 = arith.constant 0 : index
    %c0_4 = arith.constant 0 : index
    %5 = vector.load %arg4[%c0_2, %c0_3, %c0_4] : memref<1x1x1024xf32, #tpu.memory_space<vmem>>, vector<1x1x1024xf32>
    tpu.vector_store %arg4[%c0_2, %c0_3, %c0_4], %4 {strides = array<i32>} : memref<1x1x1024xf32, #tpu.memory_space<vmem>>, vector<1x1x1024xf32>,
    return
  }
  func.func @transform_0(%arg0: i32, %arg1: i32) -> i32 {
    %c0_i32 = arith.constant 0 : i32
    %c0_i32_0 = arith.constant 0 : i32
    return %c0_i32 : i32
  }
  func.func @transform_1(%arg0: i32, %arg1: i32) -> (i32, i32, i32) {
    %c0_i32 = arith.constant 0 : i32
    %c0_i32_0 = arith.constant 0 : i32
    return %arg0, %arg1, %c0_i32 : i32, i32, i32
  }
  func.func @transform_2(%arg0: i32, %arg1: i32) -> (i32, i32, i32) {
    %c0_i32 = arith.constant 0 : i32
    %c0_i32_0 = arith.constant 0 : i32
    return %arg0, %arg1, %c0_i32 : i32, i32, i32
  }
}

</mosaic_0001>

<llo_original>
// kernel: drop_path.1
$region0: #{drop_path.1}
  #allocation0 [shape = 'u32[]', space=smem, size = 0x4, offset = 0x4, fixed_abs, tag = 'smem constant byte address 0x4 - core index']
  #allocation1 [shape = 'u32[144,128]{1,0:T(1,128)}', space=vmem, size = 0x12000, scoped, tag = 'internal scratch']
  %s0 = inlined_call_operand.vmem [shape: f32[2], index: 0, kind: input, shape index: {}]
  %s1 = inlined_call_operand.vmem [shape: f32[2,1,1024], index: 1, kind: input, shape index: {}]
  %s2 = inlined_call_operand.vmem [shape: f32[2,1,1024], index: 2, kind: output, shape index: {}]
  %s3 = sld [smem:[#allocation0]]
  $region45: #{drop_path.1} parent=0
    _
  %s5 = ssub.s32 1, %s3
  %s6 = scalar_select 0, %s5, %s3
  $region1: #{drop_path.1} parent=0
    #allocation2 [shape = 'u8[512]{0}', space=smem, size = 0x200, scoped, tag = 'input window, operand 0, single buffered']
    #allocation3 [shape = 's32[2]{0}', space=sflag, size = 0x8, scoped, tag = 'scoped memory for drop_path.1']
    %7 = vsyncpa [#allocation3], 0
    loop: start=0, step=1, limit=4
    $region2: #{drop_path.1} parent=1 // loop_pre_header
      _
    $region3: #{drop_path.1} parent=1 // loop_header
      %s9 = sphi 0, %s13
      %p10 = scmp.ge.s32.totalorder %s9, 4
      %s16 = sphi 0, %s28
      %s17 = sphi 0, %s24
      %s18 = sphi 0, %s16
      %s19 = sphi 0, %s17
      %s20 = sphi 0, %s18
      %s21 = sphi 0, %s19
      %s29 = sphi 0, %s29
      %s31 = sphi 0, %s29
      %s32 = sphi 0, %s31
      %s46 = sphi 0, %s32
      %s54 = sphi 0, %s56
      %s57 = sphi 0, %s54
      %s58 = sphi 0, %s57
      %s74 = sphi 0, %s58
      %s82 = sphi 0, %s84
      %s85 = sphi 0, %s82
      %s86 = sphi 0, %s85
      %s102 = sphi 0, %s86
    $region4: #{drop_path.1} parent=1 // loop_header_branch
      %12 = sbr.rel (%p10) target = $region8
    $region5: #{drop_path.1} parent=1 // loop_body
      %s14 = ssub.s32 %s9, 1
      %s15 = ssub.s32 %s9, 2
      %s22 = sadd.s32 1, %s17
      %p23 = scmp.ge.s32.totalorder %s22, 1
      %s24 = scalar_select %p23, 0, %s22
      %s25 = sadd.s32 1, %s16
      %s26 = scalar_select %p23, %s25, %s16
      %p27 = scmp.ge.s32.totalorder %s26, 2
      %s28 = scalar_select %p27, 0, %s26
      %s30 = sadd.s32 %s29, 1
      %p33 = scmp.eq.s32.totalorder %s9, 1
      %p34 = scmp.ne.s32.totalorder %s29, %s31
      %p35 = scmp.eq.s32.totalorder %s9, 0
      %p36 = por %p34, %p35
      %p37 = scmp.ne.s32.totalorder %s29, %s31
      %p38 = scmp.eq.s32.totalorder %s14, 1
      %p39 = por %p37, %p38
      %p40 = scmp.ne.s32.totalorder %s31, %s32
      %p41 = scmp.eq.s32.totalorder %s14, 0
      %p42 = por %p40, %p41
      %p43 = scmp.ne.s32.totalorder %s31, %s32
      %p44 = scmp.eq.s32.totalorder %s15, 1
      %p45 = por %p43, %p44
      %p47 = scmp.ne.s32.totalorder %s32, %s46
      %p48 = scmp.eq.s32.totalorder %s15, 0
      %p49 = por %p47, %p48
      %s50 = ssub.s32 %s16, %s28
      %s51 = ssub.s32 %s17, %s24
      %s52 = sor.u32 %s50, %s51
      %p53 = scmp.eq.s32.totalorder %s52, 0
      %s55 = sadd.s32 %s54, 1
      %s56 = scalar_select %p53, %s54, %s55
      %p59 = pneg %p53
      %p60 = scmp.eq.s32.totalorder %s9, 1
      %p61 = por %p59, %p60
      %p62 = scmp.ne.s32.totalorder %s54, %s57
      %p63 = scmp.eq.s32.totalorder %s9, 0
      %p64 = por %p62, %p63
      %p65 = scmp.ne.s32.totalorder %s54, %s57
      %p66 = scmp.eq.s32.totalorder %s14, 1
      %p67 = por %p65, %p66
      %p68 = scmp.ne.s32.totalorder %s57, %s58
      %p69 = scmp.eq.s32.totalorder %s14, 0
      %p70 = por %p68, %p69
      %p71 = scmp.ne.s32.totalorder %s57, %s58
      %p72 = scmp.eq.s32.totalorder %s15, 1
      %p73 = por %p71, %p72
      %p75 = scmp.ne.s32.totalorder %s58, %s74
      %p76 = scmp.eq.s32.totalorder %s15, 0
      %p77 = por %p75, %p76
      %s78 = ssub.s32 %s16, %s28
      %s79 = ssub.s32 %s17, %s24
      %s80 = sor.u32 %s78, %s79
      %p81 = scmp.eq.s32.totalorder %s80, 0
      %s83 = sadd.s32 %s82, 1
      %s84 = scalar_select %p81, %s82, %s83
      %p87 = pneg %p81
      %p88 = scmp.eq.s32.totalorder %s9, 1
      %p89 = por %p87, %p88
      %p90 = scmp.ne.s32.totalorder %s82, %s85
      %p91 = scmp.eq.s32.totalorder %s9, 0
      %p92 = por %p90, %p91
      %p93 = scmp.ne.s32.totalorder %s82, %s85
      %p94 = scmp.eq.s32.totalorder %s14, 1
      %p95 = por %p93, %p94
      %p96 = scmp.ne.s32.totalorder %s85, %s86
      %p97 = scmp.eq.s32.totalorder %s14, 0
      %p98 = por %p96, %p97
      %p99 = scmp.ne.s32.totalorder %s85, %s86
      %p100 = scmp.eq.s32.totalorder %s15, 1
      %p101 = por %p99, %p100
      %p103 = scmp.ne.s32.totalorder %s86, %s102
      %p104 = scmp.eq.s32.totalorder %s15, 0
      %p105 = por %p103, %p104
      %p106 = scmp.le.s32.totalorder 1, %s9
      %p107 = scmp.lt.s32.totalorder %s9, 3
      %p108 = pnand %p106, %p107
      %p109 = pneg %p108
      // Predicated region
      $region9: #{drop_path.1} parent=5 // pred_check
        _
      $region10: #{drop_path.1} parent=5 // pred_check_branch
        %111 = sbr.rel (%p108) target = $region12
      $region11: #{drop_path.1} parent=5 // pred_region
        %s112 = ssub.s32 %s9, 1
        // Predicated region
        $region13: #{drop_path.1} parent=11 // pred_check
          %p113 = pneg %p42
        $region14: #{drop_path.1} parent=11 // pred_check_branch
          %115 = sbr.rel (%p113) target = $region16
        $region15: #{drop_path.1} parent=11 // pred_region
          %s117 = ssub.s32 16, 16
          %118 = vsyncadd [#allocation3], %s117
          %s120 = sshll.u32 %s0, 4
          %s121 = int_to_ptr.vmem [resolvable:$true] %s120
          %123 = dma.vmem_to_smem %s121, 16, [#allocation2], [#allocation3]
        $region16: #{drop_path.1} parent=11 // pred_fallthru
          _
      $region12: #{drop_path.1} parent=5 // pred_fallthru
        _
      %p124 = scmp.lt.s32.totalorder %s9, 2
      // Predicated region
      $region17: #{drop_path.1} parent=5 // pred_check
        %p125 = pneg %p124
      $region18: #{drop_path.1} parent=5 // pred_check_branch
        %127 = sbr.rel (%p125) target = $region20
      $region19: #{drop_path.1} parent=5 // pred_region
        // Predicated region
        $region21: #{drop_path.1} parent=19 // pred_check
          %p128 = pneg %p64
        $region22: #{drop_path.1} parent=19 // pred_check_branch
          %130 = sbr.rel (%p128) target = $region24
        $region23: #{drop_path.1} parent=19 // pred_region
          %p131 = scmp.lt.s32.totalorder %s16, 1
          %s132 = scalar_select %p131, %s16, 1
          %p133 = scmp.lt.s32.totalorder %s17, 0
          %s134 = scalar_select %p133, %s17, 0
          %s135 = smul.addr %s134, 8
          %s136 = smul.addr %s132, 8
          %s137 = sadd.s32 %s135, %s136
          %s138 = scalar_lea.vmem %s1, %s137
        $region24: #{drop_path.1} parent=19 // pred_fallthru
          _
      $region20: #{drop_path.1} parent=5 // pred_fallthru
        _
      %p139 = scmp.le.s32.totalorder 1, %s9
      %p140 = scmp.lt.s32.totalorder %s9, 3
      %p141 = pnand %p139, %p140
      %p142 = pneg %p141
      // Predicated region
      $region25: #{drop_path.1} parent=5 // pred_check
        _
      $region26: #{drop_path.1} parent=5 // pred_check_branch
        %144 = sbr.rel (%p141) target = $region28
      $region27: #{drop_path.1} parent=5 // pred_region
        %s145 = ssub.s32 %s9, 1
        // Predicated region
        $region29: #{drop_path.1} parent=27 // pred_check
          %p146 = pneg %p42
        $region30: #{drop_path.1} parent=27 // pred_check_branch
          %148 = sbr.rel (%p146) target = $region32
        $region31: #{drop_path.1} parent=27 // pred_region
          %149 = dma.done [#allocation3], 16
        $region32: #{drop_path.1} parent=27 // pred_fallthru
          _
        %150 = sfence
        %p151 = pneg %p42
        %p152 = pneg %p39
        %p153 = scmp.lt.s32.totalorder %s18, 1
        %s154 = scalar_select %p153, %s18, 1
        %p155 = scmp.lt.s32.totalorder %s19, 0
        %s156 = scalar_select %p155, %s19, 0
        %s157 = smul.addr %s156, 8
        %s158 = smul.addr %s154, 8
        %s159 = sadd.s32 %s157, %s158
        %s160 = scalar_lea.vmem %s1, %s159
        %p161 = pneg %p70
        %p162 = pneg %p67
        %p163 = pneg %p98
        %p164 = pneg %p95
        %p165 = scmp.lt.s32.totalorder %s18, 1
        %s166 = scalar_select %p165, %s18, 1
        %p167 = scmp.lt.s32.totalorder %s19, 0
        %s168 = scalar_select %p167, %s19, 0
        %s169 = smul.addr %s168, 8
        %s170 = smul.addr %s166, 8
        %s171 = sadd.s32 %s169, %s170
        %s172 = scalar_lea.vmem %s2, %s171
        %p173 = scmp.lt.s32.totalorder %s18, 1
        %s174 = scalar_select %p173, %s18, 1
        %p175 = scmp.lt.s32.totalorder %s19, 0
        %s176 = scalar_select %p175, %s19, 0
        %s177 = smul.addr %s176, 8
        %s178 = smul.addr %s174, 8
        %s179 = sadd.s32 %s177, %s178
        %s180 = scalar_lea.vmem %s1, %s179
        %p181 = scmp.lt.s32.totalorder %s18, 1
        %s182 = scalar_select %p181, %s18, 1
        %p183 = scmp.lt.s32.totalorder %s19, 0
        %s184 = scalar_select %p183, %s19, 0
        %s185 = smul.addr %s184, 8
        %s186 = smul.addr %s182, 8
        %s187 = sadd.s32 %s185, %s186
        %s188 = scalar_lea.vmem %s2, %s187
        %s189 = sld [smem:[#allocation2 + %s18]]
        %v190 = vld [vmem:[%s180] sm:$0xff]
        %v191 = vstv %s189
        %v192 = vmul.f32 %v190, %v191
        %193 = vst [vmem:[%s188] sm:$0xff] %v192
        %p194 = scmp.lt.s32.totalorder %s18, 1
        %s195 = scalar_select %p194, %s18, 1
        %p196 = scmp.lt.s32.totalorder %s19, 0
        %s197 = scalar_select %p196, %s19, 0
        %s198 = smul.addr %s197, 8
        %s199 = smul.addr %s195, 8
        %s200 = sadd.s32 %s198, %s199
        %s201 = scalar_lea.vmem %s2, %s200
        // Predicated region
        $region33: #{drop_path.1} parent=27 // pred_check
          %p202 = pneg %p95
        $region34: #{drop_path.1} parent=27 // pred_check_branch
          %204 = sbr.rel (%p202) target = $region36
        $region35: #{drop_path.1} parent=27 // pred_region
          _
        $region36: #{drop_path.1} parent=27 // pred_fallthru
          _
      $region28: #{drop_path.1} parent=5 // pred_fallthru
        _
      %p205 = scmp.le.s32.totalorder 2, %s9
      // Predicated region
      $region37: #{drop_path.1} parent=5 // pred_check
        %p206 = pneg %p205
      $region38: #{drop_path.1} parent=5 // pred_check_branch
        %208 = sbr.rel (%p206) target = $region40
      $region39: #{drop_path.1} parent=5 // pred_region
        %s209 = ssub.s32 %s9, 2
        // Predicated region
        $region41: #{drop_path.1} parent=39 // pred_check
          %p210 = pneg %p101
        $region42: #{drop_path.1} parent=39 // pred_check_branch
          %212 = sbr.rel (%p210) target = $region44
        $region43: #{drop_path.1} parent=39 // pred_region
          %p213 = scmp.lt.s32.totalorder %s20, 1
          %s214 = scalar_select %p213, %s20, 1
          %p215 = scmp.lt.s32.totalorder %s21, 0
          %s216 = scalar_select %p215, %s21, 0
          %s217 = smul.addr %s216, 8
          %s218 = smul.addr %s214, 8
          %s219 = sadd.s32 %s217, %s218
          %s220 = scalar_lea.vmem %s2, %s219
        $region44: #{drop_path.1} parent=39 // pred_fallthru
          _
      $region40: #{drop_path.1} parent=5 // pred_fallthru
        _
    $region6: #{drop_path.1} parent=1 // loop_footer
      %s13 = sadd.s32 1, %s9
    $region7: #{drop_path.1} parent=1 // loop_footer_branch
      %8 = sbr.rel target = $region3
    $region8: #{drop_path.1} parent=1 // loop_exit
      _
    %221 = vsyncpa [#allocation3], 1
    %s222 = scalar_lea.sflag [#allocation3], 1
    %223 = vsyncpa %s222, 1

</llo_original>
